<compile_context>
chip_gen: v6e
topology: v6e:2x2x1
jax: 0.10.0
libtpu: 0.0.40
codegen_flags: <defaults>
</compile_context>

<pallas_src>
import math

import jax
import jax.numpy as jnp
from jax.experimental import pallas as pl
from jax.experimental.pallas import tpu as pltpu


def _round_up(x, m):
    return ((x + m - 1) // m) * m


def _chip_defaults():
    """Chip-aware (tile_b cap, scoped-VMEM limit) defaults."""
    try:
        vmem = int(pltpu.get_tpu_info().vmem_capacity_bytes)
    except Exception:
        vmem = None
    if vmem is not None and vmem >= 100 * 1024 * 1024:   # v5e / v6e: 128 MiB VMEM
        return 4096, 64 * 1024 * 1024
    return 2048, 48 * 1024 * 1024                        # v7x-class: 64 MiB VMEM


def _choose_tiling(batch, tile_b_cap):
    """(tile_b, padded_batch): tile_b is a multiple of 128 that divides the
    padded batch, with >=2 grid steps whenever the batch allows (v7x: 2 TCs)."""
    cap = max(128, (int(tile_b_cap) // 128) * 128)
    b128 = _round_up(max(int(batch), 1), 128)
    steps = max(-(-b128 // cap), 2 if b128 >= 256 else 1)
    tile_b = _round_up(-(-b128 // steps), 128)
    return tile_b, tile_b * steps


# ----------------------------------------------------------------------------
# Pallas kernel: one TILE_B-column batch tile of the critic MLP (feature-major:
# activations are (features, batch), batch rides the 128-wide lane axis).
# ----------------------------------------------------------------------------
def critic_kernel(s_ref, a_ref, w1_ref, b1_ref, w2_ref, b2_ref, w3_ref, b3_ref,
                  q_ref, xbuf_ref):
    sd = s_ref.shape[0]
    in_dim = xbuf_ref.shape[0]

    # Fused state/action concat: two sublane-slice stores into a VMEM scratch
    # (no (B, state_dim+action_dim) concat is ever materialized in HBM), so
    # fc1 is a single matmul against the full resident weight.
    xbuf_ref[0:sd, :] = s_ref[...]                       # (state_dim, TILE_B)
    xbuf_ref[sd:in_dim, :] = a_ref[...]                  # (action_dim, TILE_B)
    x = xbuf_ref[...].astype(w1_ref.dtype)               # in-kernel cast (bf16)

    # fc1 + relu:  (hidden, in_dim) @ (in_dim, TILE_B) -> f32 (hidden, TILE_B)
    h1 = jnp.dot(w1_ref[...], x, preferred_element_type=jnp.float32) + b1_ref[...]
    h1 = jnp.maximum(h1, 0.0)                            # f32 elementwise (v5e-safe)

    # fc2 + relu:  (hidden, hidden) @ (hidden, TILE_B)
    h2 = jnp.dot(w2_ref[...], h1.astype(w2_ref.dtype),
                 preferred_element_type=jnp.float32) + b2_ref[...]
    h2 = jnp.maximum(h2, 0.0)

    # q_layer: M=1 f32 MXU matmul -> naturally lane-dense (1, TILE_B) row.
    q = jnp.dot(w3_ref[...], h2, preferred_element_type=jnp.float32) + b3_ref[...]
    q_ref[...] = q.astype(q_ref.dtype)


# ----------------------------------------------------------------------------
# One-time parameter prep (hoisted out of the per-call path): transpose to the
# feature-major layout and cast dot inputs to the compute dtype (bf16 default).
# ----------------------------------------------------------------------------
def prepare_critic_params(params, compute_dtype=jnp.bfloat16):
    w1, b1, w2, b2, w3, b3 = params
    w1t = jnp.asarray(w1.T, dtype=compute_dtype)               # (hidden, in_dim)
    w2t = jnp.asarray(w2.T, dtype=compute_dtype)               # (hidden, hidden)
    b1c = jnp.asarray(b1.reshape(-1, 1), dtype=jnp.float32)    # (hidden, 1)
    b2c = jnp.asarray(b2.reshape(-1, 1), dtype=jnp.float32)    # (hidden, 1)
    w3r = jnp.asarray(w3.reshape(1, -1), dtype=jnp.float32)    # (1, hidden)
    b3c = jnp.asarray(b3.reshape(1, 1), dtype=jnp.float32)     # (1, 1)
    return (w1t, b1c, w2t, b2c, w3r, b3c)


# ----------------------------------------------------------------------------
# Wrapper: batch tiling, VMEM-resident weights, lane-dense output.
# ----------------------------------------------------------------------------
def critic_forward(state, action, prepped, *, tile_b=None, vmem_limit_bytes=None):
    """Pallas-backed CriticNetwork forward: q = MLP(concat(state, action))."""
    w1t, b1c, w2t, b2c, w3r, b3c = prepped
    B, sd = state.shape
    ad = action.shape[1]
    hidden, in_dim = w1t.shape
    assert in_dim == sd + ad, "prepared params do not match state/action dims"

    cap, vmem_default = _chip_defaults()
    if tile_b is None:
        tile_b = cap
    if vmem_limit_bytes is None:
        vmem_limit_bytes = vmem_default
    tile_b, b_pad = _choose_tiling(B, tile_b)
    grid = (b_pad // tile_b,)

    # Feature-major activations: (features, batch).  Tiny transpose+pad pass
    # (kept f32; all compute-dtype casts stay inside the kernel).
    s_t = jnp.pad(jnp.transpose(state).astype(jnp.float32),
                  ((0, 0), (0, b_pad - B)))
    a_t = jnp.pad(jnp.transpose(action).astype(jnp.float32),
                  ((0, 0), (0, b_pad - B)))

    batch_map = lambda i: (0, i)    # activation/output tiles walk the batch axis
    resident = lambda i: (0, 0)     # weights/biases stay put across grid steps

    nbytes = lambda x: int(x.size) * x.dtype.itemsize
    flops = 2 * b_pad * (in_dim * hidden + hidden * hidden + hidden)
    bytes_accessed = (nbytes(s_t) + nbytes(a_t) + b_pad * 4
                      + sum(nbytes(t) for t in (w1t, b1c, w2t, b2c, w3r, b3c)))

    out = pl.pallas_call(
        critic_kernel,
        out_shape=jax.ShapeDtypeStruct((1, b_pad), jnp.float32),
        grid=grid,
        in_specs=[
            pl.BlockSpec((sd, tile_b), batch_map),
            pl.BlockSpec((ad, tile_b), batch_map),
            pl.BlockSpec(w1t.shape, resident),
            pl.BlockSpec(b1c.shape, resident),
            pl.BlockSpec(w2t.shape, resident),
            pl.BlockSpec(b2c.shape, resident),
            pl.BlockSpec(w3r.shape, resident),
            pl.BlockSpec(b3c.shape, resident),
        ],
        out_specs=pl.BlockSpec((1, tile_b), batch_map),   # lane-dense, contiguous
        scratch_shapes=[pltpu.VMEM((in_dim, tile_b), jnp.float32)],
        compiler_params=pltpu.CompilerParams(
            dimension_semantics=("parallel",),            # spans both TCs on v7x
            vmem_limit_bytes=vmem_limit_bytes,
        ),
        cost_estimate=pl.CostEstimate(
            flops=flops, transcendentals=0, bytes_accessed=bytes_accessed),
    )(s_t, a_t, w1t, b1c, w2t, b2c, w3r, b3c)

    return out[0, :B].reshape(B, 1)


# ----------------------------------------------------------------------------
# Deterministic parameter init: Xavier-uniform weights (as in the PyTorch
# module); biases follow nn.Linear's default U(-1/sqrt(fan_in), 1/sqrt(fan_in)).
# ----------------------------------------------------------------------------
def xavier_uniform(key, fan_in, fan_out):
    limit = math.sqrt(6.0 / (fan_in + fan_out))
    return jax.random.uniform(key, (fan_in, fan_out), jnp.float32, -limit, limit)


def linear_bias(key, fan_in, fan_out):
    bound = 1.0 / math.sqrt(fan_in)
    return jax.random.uniform(key, (1, fan_out), jnp.float32, -bound, bound)


def init_critic_params(key, state_dim, action_dim, hidden_dim=256):
    in_dim = state_dim + action_dim
    k = jax.random.split(key, 6)
    w1 = xavier_uniform(k[0], in_dim, hidden_dim)         # (in_dim, hidden)
    b1 = linear_bias(k[1], in_dim, hidden_dim)            # (1, hidden)
    w2 = xavier_uniform(k[2], hidden_dim, hidden_dim)     # (hidden, hidden)
    b2 = linear_bias(k[3], hidden_dim, hidden_dim)        # (1, hidden)
    w3 = xavier_uniform(k[4], hidden_dim, 1)              # (hidden, 1)
    b3 = linear_bias(k[5], hidden_dim, 1)                 # (1, 1)
    return (w1, b1, w2, b2, w3, b3)


# Pure-JAX reference (identical math to the PyTorch module).
def critic_reference(state, action, params):
    w1, b1, w2, b2, w3, b3 = params
    x = jnp.concatenate([state, action], axis=1)
    h1 = jnp.maximum(x @ w1 + b1, 0.0)
    h2 = jnp.maximum(h1 @ w2 + b2, 0.0)
    return h2 @ w3 + b3


if __name__ == "__main__":
    # Small shapes consistent with the module's forward.
    batch, state_dim, action_dim, hidden_dim = 2, 8, 4, 32

    key = jax.random.PRNGKey(0)
    k_state, k_action, k_params = jax.random.split(key, 3)

    state = jax.random.normal(k_state, (batch, state_dim), jnp.float32)
    action = jax.random.normal(k_action, (batch, action_dim), jnp.float32)
    params = init_critic_params(k_params, state_dim, action_dim, hidden_dim)
    q_ref = critic_reference(state, action, params)

    # f32 path -- exact module semantics.
    prepped_f32 = prepare_critic_params(params, compute_dtype=jnp.float32)
    q = critic_forward(state, action, prepped_f32)
    jax.block_until_ready(q)
    assert q.shape == (batch, 1)
    assert jnp.allclose(q, q_ref, atol=1e-3, rtol=1e-3)

    # bf16 dot inputs (default) with f32 accumulation -- looser tolerance.
    prepped_bf16 = prepare_critic_params(params)
    q_bf16 = critic_forward(state, action, prepped_bf16)
    jax.block_until_ready(q_bf16)
    assert q_bf16.shape == (batch, 1)
    assert jnp.allclose(q_bf16, q_ref, atol=7e-2, rtol=7e-2)

    # Multi-step grid: batch padding + forced >=2 "parallel" steps.
    b2 = 300
    k_s2, k_a2 = jax.random.split(jax.random.PRNGKey(1))
    state2 = jax.random.normal(k_s2, (b2, state_dim), jnp.float32)
    action2 = jax.random.normal(k_a2, (b2, action_dim), jnp.float32)
    q2 = critic_forward(state2, action2, prepped_f32, tile_b=512)
    jax.block_until_ready(q2)
    q2_ref = critic_reference(state2, action2, params)
    assert q2.shape == (b2, 1)
    assert jnp.allclose(q2, q2_ref, atol=1e-3, rtol=1e-3)

    print("KERNEL_OK")
</pallas_src>

<mosaic_0001>
module attributes {stable_mosaic.version = 11 : i64} {
  func.func @critic_kernel(%arg0: i32, %arg1: memref<8x128xf32, #tpu.memory_space<vmem>>, %arg2: memref<4x128xf32, #tpu.memory_space<vmem>>, %arg3: memref<32x12xf32, #tpu.memory_space<vmem>>, %arg4: memref<32x1xf32, #tpu.memory_space<vmem>>, %arg5: memref<32x32xf32, #tpu.memory_space<vmem>>, %arg6: memref<32x1xf32, #tpu.memory_space<vmem>>, %arg7: memref<1x32xf32, #tpu.memory_space<vmem>>, %arg8: memref<1x1xf32, #tpu.memory_space<vmem>>, %arg9: memref<1x128xf32, #tpu.memory_space<vmem>>, %arg10: memref<12x128xf32, #tpu.memory_space<vmem>>) attributes {dimension_semantics = [#tpu.dimension_semantics<parallel>], iteration_bounds = array<i64: 1>, scalar_prefetch = 0 : i64, scratch_operands = 1 : i64, tpu.core_type = #tpu.core_type<tc>, window_params = [{transform_indices = @transform_0, window_bounds = array<i64: 8, 128>}, {transform_indices = @transform_1, window_bounds = array<i64: 4, 128>}, {pipeline_mode = #tpu.pipeline_mode<synchronous>, transform_indices = @transform_2, window_bounds = array<i64: 32, 12>}, {pipeline_mode = #tpu.pipeline_mode<synchronous>, transform_indices = @transform_3, window_bounds = array<i64: 32, 1>}, {pipeline_mode = #tpu.pipeline_mode<synchronous>, transform_indices = @transform_4, window_bounds = array<i64: 32, 32>}, {pipeline_mode = #tpu.pipeline_mode<synchronous>, transform_indices = @transform_5, window_bounds = array<i64: 32, 1>}, {pipeline_mode = #tpu.pipeline_mode<synchronous>, transform_indices = @transform_6, window_bounds = array<i64: 1, 32>}, {pipeline_mode = #tpu.pipeline_mode<synchronous>, transform_indices = @transform_7, window_bounds = array<i64: 1, 1>}, {transform_indices = @transform_8, window_bounds = array<i64: 1, 128>}]} {
    %c0 = arith.constant 0 : index
    %c0_0 = arith.constant 0 : index
    %0 = vector.load %arg1[%c0, %c0_0] : memref<8x128xf32, #tpu.memory_space<vmem>>, vector<8x128xf32>
    %c0_1 = arith.constant 0 : index
    %c0_2 = arith.constant 0 : index
    %1 = vector.load %arg10[%c0_1, %c0_2] : memref<12x128xf32, #tpu.memory_space<vmem>>, vector<8x128xf32>
    tpu.vector_store %arg10[%c0_1, %c0_2], %0 {strides = array<i32>} : memref<12x128xf32, #tpu.memory_space<vmem>>, vector<8x128xf32>,
    %c0_3 = arith.constant 0 : index
    %c0_4 = arith.constant 0 : index
    %2 = vector.load %arg2[%c0_3, %c0_4] : memref<4x128xf32, #tpu.memory_space<vmem>>, vector<4x128xf32>
    %c8 = arith.constant 8 : index
    %c0_5 = arith.constant 0 : index
    %3 = vector.load %arg10[%c8, %c0_5] : memref<12x128xf32, #tpu.memory_space<vmem>>, vector<4x128xf32>
    tpu.vector_store %arg10[%c8, %c0_5], %2 {strides = array<i32>} : memref<12x128xf32, #tpu.memory_space<vmem>>, vector<4x128xf32>,
    %c0_6 = arith.constant 0 : index
    %c0_7 = arith.constant 0 : index
    %4 = vector.load %arg10[%c0_6, %c0_7] : memref<12x128xf32, #tpu.memory_space<vmem>>, vector<12x128xf32>
    %c0_8 = arith.constant 0 : index
    %c0_9 = arith.constant 0 : index
    %5 = vector.load %arg3[%c0_8, %c0_9] : memref<32x12xf32, #tpu.memory_space<vmem>>, vector<32x12xf32>
    %cst = arith.constant dense<0.000000e+00> : vector<32x128xf32>
    %6 = tpu.matmul %5, %4, %cst {dimension_numbers = #tpu.dot_dimension_numbers<[1], [0], [0], [1], [0, 0, 1, 1], [], []>} : vector<32x12xf32>, vector<12x128xf32>, vector<32x128xf32> -> vector<32x128xf32>
    %c0_10 = arith.constant 0 : index
    %c0_11 = arith.constant 0 : index
    %7 = vector.load %arg4[%c0_10, %c0_11] : memref<32x1xf32, #tpu.memory_space<vmem>>, vector<32x1xf32>
    %8 = vector.broadcast %7 : vector<32x1xf32> to vector<32x128xf32>
    %9 = arith.addf %6, %8 : vector<32x128xf32>
    %cst_12 = arith.constant 0.000000e+00 : f32
    %10 = vector.broadcast %cst_12 : f32 to vector<32x128xf32>
    %11 = arith.maximumf %9, %10 : vector<32x128xf32>
    %c0_13 = arith.constant 0 : index
    %c0_14 = arith.constant 0 : index
    %12 = vector.load %arg5[%c0_13, %c0_14] : memref<32x32xf32, #tpu.memory_space<vmem>>, vector<32x32xf32>
    %cst_15 = arith.constant dense<0.000000e+00> : vector<32x128xf32>
    %13 = tpu.matmul %12, %11, %cst_15 {dimension_numbers = #tpu.dot_dimension_numbers<[1], [0], [0], [1], [0, 0, 1, 1], [], []>} : vector<32x32xf32>, vector<32x128xf32>, vector<32x128xf32> -> vector<32x128xf32>
    %c0_16 = arith.constant 0 : index
    %c0_17 = arith.constant 0 : index
    %14 = vector.load %arg6[%c0_16, %c0_17] : memref<32x1xf32, #tpu.memory_space<vmem>>, vector<32x1xf32>
    %15 = vector.broadcast %14 : vector<32x1xf32> to vector<32x128xf32>
    %16 = arith.addf %13, %15 : vector<32x128xf32>
    %cst_18 = arith.constant 0.000000e+00 : f32
    %17 = vector.broadcast %cst_18 : f32 to vector<32x128xf32>
    %18 = arith.maximumf %16, %17 : vector<32x128xf32>
    %c0_19 = arith.constant 0 : index
    %c0_20 = arith.constant 0 : index
    %19 = vector.load %arg7[%c0_19, %c0_20] : memref<1x32xf32, #tpu.memory_space<vmem>>, vector<1x32xf32>
    %cst_21 = arith.constant dense<0.000000e+00> : vector<1x128xf32>
    %20 = tpu.matmul %19, %18, %cst_21 {dimension_numbers = #tpu.dot_dimension_numbers<[1], [0], [0], [1], [0, 0, 1, 1], [], []>} : vector<1x32xf32>, vector<32x128xf32>, vector<1x128xf32> -> vector<1x128xf32>
    %c0_22 = arith.constant 0 : index
    %c0_23 = arith.constant 0 : index
    %21 = vector.load %arg8[%c0_22, %c0_23] : memref<1x1xf32, #tpu.memory_space<vmem>>, vector<1x1xf32>
    %22 = vector.broadcast %21 : vector<1x1xf32> to vector<1x128xf32>
    %23 = arith.addf %20, %22 : vector<1x128xf32>
    %c0_24 = arith.constant 0 : index
    %c0_25 = arith.constant 0 : index
    %24 = vector.load %arg9[%c0_24, %c0_25] : memref<1x128xf32, #tpu.memory_space<vmem>>, vector<1x128xf32>
    tpu.vector_store %arg9[%c0_24, %c0_25], %23 {strides = array<i32>} : memref<1x128xf32, #tpu.memory_space<vmem>>, vector<1x128xf32>,
    return
  }
  func.func @transform_0(%arg0: i32) -> (i32, i32) {
    %c0_i32 = arith.constant 0 : i32
    %c0_i32_0 = arith.constant 0 : i32
    return %c0_i32, %arg0 : i32, i32
  }
  func.func @transform_1(%arg0: i32) -> (i32, i32) {
    %c0_i32 = arith.constant 0 : i32
    %c0_i32_0 = arith.constant 0 : i32
    return %c0_i32, %arg0 : i32, i32
  }
  func.func @transform_2(%arg0: i32) -> (i32, i32) {
    %c0_i32 = arith.constant 0 : i32
    %c0_i32_0 = arith.constant 0 : i32
    %c0_i32_1 = arith.constant 0 : i32
    return %c0_i32, %c0_i32_0 : i32, i32
  }
  func.func @transform_3(%arg0: i32) -> (i32, i32) {
    %c0_i32 = arith.constant 0 : i32
    %c0_i32_0 = arith.constant 0 : i32
    %c0_i32_1 = arith.constant 0 : i32
    return %c0_i32, %c0_i32_0 : i32, i32
  }
  func.func @transform_4(%arg0: i32) -> (i32, i32) {
    %c0_i32 = arith.constant 0 : i32
    %c0_i32_0 = arith.constant 0 : i32
    %c0_i32_1 = arith.constant 0 : i32
    return %c0_i32, %c0_i32_0 : i32, i32
  }
  func.func @transform_5(%arg0: i32) -> (i32, i32) {
    %c0_i32 = arith.constant 0 : i32
    %c0_i32_0 = arith.constant 0 : i32
    %c0_i32_1 = arith.constant 0 : i32
    return %c0_i32, %c0_i32_0 : i32, i32
  }
  func.func @transform_6(%arg0: i32) -> (i32, i32) {
    %c0_i32 = arith.constant 0 : i32
    %c0_i32_0 = arith.constant 0 : i32
    %c0_i32_1 = arith.constant 0 : i32
    return %c0_i32, %c0_i32_0 : i32, i32
  }
  func.func @transform_7(%arg0: i32) -> (i32, i32) {
    %c0_i32 = arith.constant 0 : i32
    %c0_i32_0 = arith.constant 0 : i32
    %c0_i32_1 = arith.constant 0 : i32
    return %c0_i32, %c0_i32_0 : i32, i32
  }
  func.func @transform_8(%arg0: i32) -> (i32, i32) {
    %c0_i32 = arith.constant 0 : i32
    %c0_i32_0 = arith.constant 0 : i32
    return %c0_i32, %arg0 : i32, i32
  }
}

</mosaic_0001>

<llo_original>
// kernel: tpu_custom_call.1
$region0: #{tpu_custom_call.1}
  #allocation0 [shape = 'u32[]', space=smem, size = 0x4, offset = 0x4, fixed_abs, tag = 'smem constant byte address 0x4 - core index']
  #allocation1 [shape = 'u32[144,128]{1,0:T(1,128)}', space=vmem, size = 0x12000, scoped, tag = 'internal scratch']
  #allocation2 [shape = 'f32[12,128]{1,0:T(8,128)}', space=vmem, size = 0x2000, scoped, tag = 'scratch operand']
  #allocation3 [shape = 'f32[1,1]{1,0:T(1,128)S(1)}', space=vmem, size = 0x200, scoped, tag = 'scoped memory for tpu_custom_call.1']
  %s0 = inlined_call_operand.vmem [shape: f32[8,128], index: 0, kind: input, shape index: {}]
  %s1 = inlined_call_operand.vmem [shape: f32[4,128], index: 1, kind: input, shape index: {}]
  %s2 = inlined_call_operand.vmem [shape: f32[32,12], index: 2, kind: input, shape index: {}]
  %s3 = inlined_call_operand.vmem [shape: f32[32,1], index: 3, kind: input, shape index: {}]
  %s4 = inlined_call_operand.vmem [shape: f32[32,32], index: 4, kind: input, shape index: {}]
  %s5 = inlined_call_operand.vmem [shape: f32[32,1], index: 5, kind: input, shape index: {}]
  %s6 = inlined_call_operand.vmem [shape: f32[1,32], index: 6, kind: input, shape index: {}]
  %s7 = inlined_call_operand.<no memory space> [shape: f32[1,1], index: 7, kind: input, shape index: {}]
  %s8 = inlined_call_operand.hbm [shape: f32[1,128], index: 8, kind: output, shape index: {}]
  %s9 = sld [smem:[#allocation0]]
  $region42: #{tpu_custom_call.1} parent=0
    _
  %s11 = ssub.s32 1, %s9
  %s12 = scalar_select 0, %s11, %s9
  %v13 = vstv %s7
  %14 = vst [vmem:[#allocation3] sm:$0x1] %v13
  $region1: #{tpu_custom_call.1} parent=0
    #allocation4 [shape = 'u8[512]{0}', space=vmem, size = 0x400, scoped, tag = 'output window, operand 0, single buffered']
    #allocation5 [shape = 's32[1]{0}', space=sflag, size = 0x4, scoped, tag = 'scoped memory for tpu_custom_call.1']
    %15 = vsyncpa [#allocation5], 0
    // Predicated region
    $region2: #{tpu_custom_call.1} parent=1 // pred_check
      _
    $region3: #{tpu_custom_call.1} parent=1 // pred_check_branch
      %17 = sbr.rel (0) target = $region5
    $region4: #{tpu_custom_call.1} parent=1 // pred_region
      _
    $region5: #{tpu_custom_call.1} parent=1 // pred_fallthru
      _
    // Predicated region
    $region6: #{tpu_custom_call.1} parent=1 // pred_check
      _
    $region7: #{tpu_custom_call.1} parent=1 // pred_check_branch
      %19 = sbr.rel (0) target = $region9
    $region8: #{tpu_custom_call.1} parent=1 // pred_region
      _
    $region9: #{tpu_custom_call.1} parent=1 // pred_fallthru
      _
    // Predicated region
    $region10: #{tpu_custom_call.1} parent=1 // pred_check
      _
    $region11: #{tpu_custom_call.1} parent=1 // pred_check_branch
      %21 = sbr.rel (0) target = $region13
    $region12: #{tpu_custom_call.1} parent=1 // pred_region
      _
    $region13: #{tpu_custom_call.1} parent=1 // pred_fallthru
      _
    // Predicated region
    $region14: #{tpu_custom_call.1} parent=1 // pred_check
      _
    $region15: #{tpu_custom_call.1} parent=1 // pred_check_branch
      %23 = sbr.rel (0) target = $region17
    $region16: #{tpu_custom_call.1} parent=1 // pred_region
      _
    $region17: #{tpu_custom_call.1} parent=1 // pred_fallthru
      _
    // Predicated region
    $region18: #{tpu_custom_call.1} parent=1 // pred_check
      _
    $region19: #{tpu_custom_call.1} parent=1 // pred_check_branch
      %25 = sbr.rel (0) target = $region21
    $region20: #{tpu_custom_call.1} parent=1 // pred_region
      _
    $region21: #{tpu_custom_call.1} parent=1 // pred_fallthru
      _
    // Predicated region
    $region22: #{tpu_custom_call.1} parent=1 // pred_check
      _
    $region23: #{tpu_custom_call.1} parent=1 // pred_check_branch
      %27 = sbr.rel (0) target = $region25
    $region24: #{tpu_custom_call.1} parent=1 // pred_region
      _
    $region25: #{tpu_custom_call.1} parent=1 // pred_fallthru
      _
    // Predicated region
    $region26: #{tpu_custom_call.1} parent=1 // pred_check
      _
    $region27: #{tpu_custom_call.1} parent=1 // pred_check_branch
      %29 = sbr.rel (0) target = $region29
    $region28: #{tpu_custom_call.1} parent=1 // pred_region
      _
    $region29: #{tpu_custom_call.1} parent=1 // pred_fallthru
      _
    // Predicated region
    $region30: #{tpu_custom_call.1} parent=1 // pred_check
      _
    $region31: #{tpu_custom_call.1} parent=1 // pred_check_branch
      %31 = sbr.rel (0) target = $region33
    $region32: #{tpu_custom_call.1} parent=1 // pred_region
      _
    $region33: #{tpu_custom_call.1} parent=1 // pred_fallthru
      _
    %v32 = vld [vmem:[%s0] sm:$0xff]
    %33 = vst [vmem:[#allocation2] sm:$0xff] %v32
    %v34 = vld [vmem:[%s1] sm:$0xf]
    %35 = vst [vmem:[#allocation2 + $0x8] sm:$0xf] %v34
    %v36 = vld [vmem:[#allocation2] sm:$0xff]
    %v37 = vld [vmem:[#allocation2 + $0x8] sm:$0xf]
    %v38 = vld [vmem:[%s2] sm:$0xff]
    %v39 = vld [vmem:[%s2 + $0x8] sm:$0xff]
    %v40 = vld [vmem:[%s2 + $0x10] sm:$0xff]
    %v41 = vld [vmem:[%s2 + $0x18] sm:$0xff]
    %v42 = vld [vmem:[%s3] sm:$0xff]
    %v43 = vld [vmem:[%s3 + $0x8] sm:$0xff]
    %v44 = vld [vmem:[%s3 + $0x10] sm:$0xff]
    %v45 = vld [vmem:[%s3 + $0x18] sm:$0xff]
    %47 = vset.pattern.permute.xlu0 0
    %48 = vperm.xlu0 %47, %v42
    %v49 = vpop.permute.xlu0 %48
    %52 = vset.pattern.permute.xlu0 0
    %53 = vperm.xlu0 %52, %v43
    %v54 = vpop.permute.xlu0 %53
    %57 = vset.pattern.permute.xlu0 0
    %58 = vperm.xlu0 %57, %v44
    %v59 = vpop.permute.xlu0 %58
    %62 = vset.pattern.permute.xlu0 0
    %63 = vperm.xlu0 %62, %v45
    %v64 = vpop.permute.xlu0 %63
    %vm66 = vcmask 97280
    %v68 = vsel %vm66, %v38, 0
    %v71 = vsel %vm66, %v39, 0
    %v74 = vsel %vm66, %v40, 0
    %v77 = vsel %vm66, %v41, 0
    %vm79 = vcmask 1043456
    %v81 = vsel %vm79, %v37, 0
    %83 = vmatprep.subr.mxu0 0.0
    %84 = vmatpush1.msra.mxu0 0.0
    %85 = vmatprep.subr.mxu0 0.0
    %86 = vmatpush1.msra.mxu0 0.0
    %87 = vmatprep.subr.mxu0 0.0
    %88 = vmatpush1.msra.mxu0 0.0
    %89 = vmatprep.subr.mxu0 0.0
    %90 = vmatpush1.msra.mxu0 0.0
    %91 = vmatprep.subr.mxu0 0.0
    %92 = vmatpush1.msra.mxu0 0.0
    %93 = vmatprep.subr.mxu0 0.0
    %94 = vmatpush1.msra.mxu0 0.0
    %95 = vmatprep.subr.mxu0 0.0
    %96 = vmatpush1.msra.mxu0 0.0
    %97 = vmatprep.subr.mxu0 0.0
    %98 = vmatpush1.msra.mxu0 0.0
    %99 = vmatprep.subr.mxu0 0.0
    %100 = vmatpush1.msra.mxu0 0.0
    %101 = vmatprep.subr.mxu0 0.0
    %102 = vmatpush1.msra.mxu0 0.0
    %103 = vmatprep.subr.mxu0 0.0
    %104 = vmatpush1.msra.mxu0 0.0
    %105 = vmatprep.subr.mxu0 0.0
    %106 = vmatpush1.msra.mxu0 0.0
    %107 = vmatprep.subr.mxu0 0.0
    %108 = vmatpush1.msra.mxu0 0.0
    %109 = vmatprep.subr.mxu0 0.0
    %110 = vmatpush1.msra.mxu0 0.0
    %111 = vmatprep.subr.mxu0 0.0
    %112 = vmatpush1.msra.mxu0 %v81
    %113 = vmatprep.subr.mxu0 0.0
    %114 = vmatpush1.msra.mxu0 %v36
    %115 = vmatprep.subr.mxu0 0.0
    %116 = vmatpush2.msra.mxu0 0.0
    %117 = vmatprep.subr.mxu0 0.0
    %118 = vmatpush2.msra.mxu0 0.0
    %119 = vmatprep.subr.mxu0 0.0
    %120 = vmatpush2.msra.mxu0 0.0
    %121 = vmatprep.subr.mxu0 0.0
    %122 = vmatpush2.msra.mxu0 0.0
    %123 = vmatprep.subr.mxu0 0.0
    %124 = vmatpush2.msra.mxu0 0.0
    %125 = vmatprep.subr.mxu0 0.0
    %126 = vmatpush2.msra.mxu0 0.0
    %127 = vmatprep.subr.mxu0 0.0
    %128 = vmatpush2.msra.mxu0 0.0
    %129 = vmatprep.subr.mxu0 0.0
    %130 = vmatpush2.msra.mxu0 0.0
    %131 = vmatprep.subr.mxu0 0.0
    %132 = vmatpush2.msra.mxu0 0.0
    %133 = vmatprep.subr.mxu0 0.0
    %134 = vmatpush2.msra.mxu0 0.0
    %135 = vmatprep.subr.mxu0 0.0
    %136 = vmatpush2.msra.mxu0 0.0
    %137 = vmatprep.subr.mxu0 0.0
    %138 = vmatpush2.msra.mxu0 0.0
    %139 = vmatprep.subr.mxu0 0.0
    %140 = vmatpush2.msra.mxu0 0.0
    %141 = vmatprep.subr.mxu0 0.0
    %142 = vmatpush2.msra.mxu0 0.0
    %143 = vmatprep.subr.mxu0 0.0
    %144 = vmatpush2.msra.mxu0 0.0
    %145 = vmatprep.subr.mxu0 0.0
    %146 = vmatpush2.msra.mxu0 0.0
    %147 = vmatprep.mubr.f32.mxu0 0.0
    %148 = vmatmul.mubr.f32.gmra.mxu0 %v68
    %v149 = vpop.f32.mrf.mxu0
    %v150 = vadd.f32 %v49, %v149
    %v151 = vpop.f32.mrf.mxu0
    %152 = vmatprep.mubr.f32.mxu0 0.0
    %153 = vmatmul.mubr.f32.gmra.mxu0 %v71
    %v154 = vpop.f32.mrf.mxu0
    %v155 = vadd.f32 %v54, %v154
    %v156 = vpop.f32.mrf.mxu0
    %157 = vmatprep.mubr.f32.mxu0 0.0
    %158 = vmatmul.mubr.f32.gmra.mxu0 %v74
    %v159 = vpop.f32.mrf.mxu0
    %v160 = vadd.f32 %v59, %v159
    %v161 = vpop.f32.mrf.mxu0
    %162 = vmatprep.mubr.f32.mxu0 0.0
    %163 = vmatmul.mubr.f32.gmra.mxu0 %v77
    %v164 = vpop.f32.mrf.mxu0
    %v165 = vadd.f32 %v64, %v164
    %v166 = vpop.f32.mrf.mxu0
    %167 = vdwg.mxu0
    %v168 = vmax.f32 %v150, 0.0
    %v169 = vmax.f32 %v155, 0.0
    %v170 = vmax.f32 %v160, 0.0
    %v171 = vmax.f32 %v165, 0.0
    %v172 = vld [vmem:[%s4] sm:$0xff]
    %v173 = vld [vmem:[%s4 + $0x8] sm:$0xff]
    %v174 = vld [vmem:[%s4 + $0x10] sm:$0xff]
    %v175 = vld [vmem:[%s4 + $0x18] sm:$0xff]
    %v176 = vld [vmem:[%s5] sm:$0xff]
    %v177 = vld [vmem:[%s5 + $0x8] sm:$0xff]
    %v178 = vld [vmem:[%s5 + $0x10] sm:$0xff]
    %v179 = vld [vmem:[%s5 + $0x18] sm:$0xff]
    %181 = vset.pattern.permute.xlu0 0
    %182 = vperm.xlu0 %181, %v176
    %v183 = vpop.permute.xlu0 %182
    %186 = vset.pattern.permute.xlu0 0
    %187 = vperm.xlu0 %186, %v177
    %v188 = vpop.permute.xlu0 %187
    %191 = vset.pattern.permute.xlu0 0
    %192 = vperm.xlu0 %191, %v178
    %v193 = vpop.permute.xlu0 %192
    %196 = vset.pattern.permute.xlu0 0
    %197 = vperm.xlu0 %196, %v179
    %v198 = vpop.permute.xlu0 %197
    %vm200 = vcmask 261120
    %v202 = vsel %vm200, %v172, 0
    %v205 = vsel %vm200, %v173, 0
    %v208 = vsel %vm200, %v174, 0
    %v211 = vsel %vm200, %v175, 0
    %213 = vmatprep.subr.mxu0 0.0
    %214 = vmatpush1.msra.mxu0 0.0
    %215 = vmatprep.subr.mxu0 0.0
    %216 = vmatpush1.msra.mxu0 0.0
    %217 = vmatprep.subr.mxu0 0.0
    %218 = vmatpush1.msra.mxu0 0.0
    %219 = vmatprep.subr.mxu0 0.0
    %220 = vmatpush1.msra.mxu0 0.0
    %221 = vmatprep.subr.mxu0 0.0
    %222 = vmatpush1.msra.mxu0 0.0
    %223 = vmatprep.subr.mxu0 0.0
    %224 = vmatpush1.msra.mxu0 0.0
    %225 = vmatprep.subr.mxu0 0.0
    %226 = vmatpush1.msra.mxu0 0.0
    %227 = vmatprep.subr.mxu0 0.0
    %228 = vmatpush1.msra.mxu0 0.0
    %229 = vmatprep.subr.mxu0 0.0
    %230 = vmatpush1.msra.mxu0 0.0
    %231 = vmatprep.subr.mxu0 0.0
    %232 = vmatpush1.msra.mxu0 0.0
    %233 = vmatprep.subr.mxu0 0.0
    %234 = vmatpush1.msra.mxu0 0.0
    %235 = vmatprep.subr.mxu0 0.0
    %236 = vmatpush1.msra.mxu0 0.0
    %237 = vmatprep.subr.mxu0 0.0
    %238 = vmatpush1.msra.mxu0 %v171
    %239 = vmatprep.subr.mxu0 0.0
    %240 = vmatpush1.msra.mxu0 %v170
    %241 = vmatprep.subr.mxu0 0.0
    %242 = vmatpush1.msra.mxu0 %v169
    %243 = vmatprep.subr.mxu0 0.0
    %244 = vmatpush1.msra.mxu0 %v168
    %245 = vmatprep.subr.mxu0 0.0
    %246 = vmatpush2.msra.mxu0 0.0
    %247 = vmatprep.subr.mxu0 0.0
    %248 = vmatpush2.msra.mxu0 0.0
    %249 = vmatprep.subr.mxu0 0.0
    %250 = vmatpush2.msra.mxu0 0.0
    %251 = vmatprep.subr.mxu0 0.0
    %252 = vmatpush2.msra.mxu0 0.0
    %253 = vmatprep.subr.mxu0 0.0
    %254 = vmatpush2.msra.mxu0 0.0
    %255 = vmatprep.subr.mxu0 0.0
    %256 = vmatpush2.msra.mxu0 0.0
    %257 = vmatprep.subr.mxu0 0.0
    %258 = vmatpush2.msra.mxu0 0.0
    %259 = vmatprep.subr.mxu0 0.0
    %260 = vmatpush2.msra.mxu0 0.0
    %261 = vmatprep.subr.mxu0 0.0
    %262 = vmatpush2.msra.mxu0 0.0
    %263 = vmatprep.subr.mxu0 0.0
    %264 = vmatpush2.msra.mxu0 0.0
    %265 = vmatprep.subr.mxu0 0.0
    %266 = vmatpush2.msra.mxu0 0.0
    %267 = vmatprep.subr.mxu0 0.0
    %268 = vmatpush2.msra.mxu0 0.0
    %269 = vmatprep.subr.mxu0 0.0
    %270 = vmatpush2.msra.mxu0 0.0
    %271 = vmatprep.subr.mxu0 0.0
    %272 = vmatpush2.msra.mxu0 0.0
    %273 = vmatprep.subr.mxu0 0.0
    %274 = vmatpush2.msra.mxu0 0.0
    %275 = vmatprep.subr.mxu0 0.0
    %276 = vmatpush2.msra.mxu0 0.0
    %277 = vmatprep.mubr.f32.mxu0 0.0
    %278 = vmatmul.mubr.f32.gmra.mxu0 %v202
    %v279 = vpop.f32.mrf.mxu0
    %v280 = vadd.f32 %v183, %v279
    %v281 = vpop.f32.mrf.mxu0
    %282 = vmatprep.mubr.f32.mxu0 0.0
    %283 = vmatmul.mubr.f32.gmra.mxu0 %v205
    %v284 = vpop.f32.mrf.mxu0
    %v285 = vadd.f32 %v188, %v284
    %v286 = vpop.f32.mrf.mxu0
    %287 = vmatprep.mubr.f32.mxu0 0.0
    %288 = vmatmul.mubr.f32.gmra.mxu0 %v208
    %v289 = vpop.f32.mrf.mxu0
    %v290 = vadd.f32 %v193, %v289
    %v291 = vpop.f32.mrf.mxu0
    %292 = vmatprep.mubr.f32.mxu0 0.0
    %293 = vmatmul.mubr.f32.gmra.mxu0 %v211
    %v294 = vpop.f32.mrf.mxu0
    %v295 = vadd.f32 %v198, %v294
    %v296 = vpop.f32.mrf.mxu0
    %297 = vdwg.mxu0
    %v298 = vmax.f32 %v280, 0.0
    %v299 = vmax.f32 %v285, 0.0
    %v300 = vmax.f32 %v290, 0.0
    %v301 = vmax.f32 %v295, 0.0
    %v302 = vld [vmem:[%s6] sm:$0x1]
    %v303 = vld [vmem:[#allocation3] sm:$0x1]
    %305 = vset.pattern.permute.xlu0 0
    %306 = vperm.xlu0 %305, %v303
    %v307 = vpop.permute.xlu0 %306
    %v309 = vlaneseq
    %v310 = vshrl.u32 %v309, 7
    %v311 = vsub.s32 0, %v310
    %v312 = vrot.slane %v307, %v311
    %v314 = vsel %vm200, %v302, 0
    %316 = vmatprep.subr.mxu0 0.0
    %317 = vmatpush1.msra.mxu0 0.0
    %318 = vmatprep.subr.mxu0 0.0
    %319 = vmatpush1.msra.mxu0 0.0
    %320 = vmatprep.subr.mxu0 0.0
    %321 = vmatpush1.msra.mxu0 0.0
    %322 = vmatprep.subr.mxu0 0.0
    %323 = vmatpush1.msra.mxu0 0.0
    %324 = vmatprep.subr.mxu0 0.0
    %325 = vmatpush1.msra.mxu0 0.0
    %326 = vmatprep.subr.mxu0 0.0
    %327 = vmatpush1.msra.mxu0 0.0
    %328 = vmatprep.subr.mxu0 0.0
    %329 = vmatpush1.msra.mxu0 0.0
    %330 = vmatprep.subr.mxu0 0.0
    %331 = vmatpush1.msra.mxu0 0.0
    %332 = vmatprep.subr.mxu0 0.0
    %333 = vmatpush1.msra.mxu0 0.0
    %334 = vmatprep.subr.mxu0 0.0
    %335 = vmatpush1.msra.mxu0 0.0
    %336 = vmatprep.subr.mxu0 0.0
    %337 = vmatpush1.msra.mxu0 0.0
    %338 = vmatprep.subr.mxu0 0.0
    %339 = vmatpush1.msra.mxu0 0.0
    %340 = vmatprep.subr.mxu0 0.0
    %341 = vmatpush1.msra.mxu0 %v301
    %342 = vmatprep.subr.mxu0 0.0
    %343 = vmatpush1.msra.mxu0 %v300
    %344 = vmatprep.subr.mxu0 0.0
    %345 = vmatpush1.msra.mxu0 %v299
    %346 = vmatprep.subr.mxu0 0.0
    %347 = vmatpush1.msra.mxu0 %v298
    %348 = vmatprep.subr.mxu0 0.0
    %349 = vmatpush2.msra.mxu0 0.0
    %350 = vmatprep.subr.mxu0 0.0
    %351 = vmatpush2.msra.mxu0 0.0
    %352 = vmatprep.subr.mxu0 0.0
    %353 = vmatpush2.msra.mxu0 0.0
    %354 = vmatprep.subr.mxu0 0.0
    %355 = vmatpush2.msra.mxu0 0.0
    %356 = vmatprep.subr.mxu0 0.0
    %357 = vmatpush2.msra.mxu0 0.0
    %358 = vmatprep.subr.mxu0 0.0
    %359 = vmatpush2.msra.mxu0 0.0
    %360 = vmatprep.subr.mxu0 0.0
    %361 = vmatpush2.msra.mxu0 0.0
    %362 = vmatprep.subr.mxu0 0.0
    %363 = vmatpush2.msra.mxu0 0.0
    %364 = vmatprep.subr.mxu0 0.0
    %365 = vmatpush2.msra.mxu0 0.0
    %366 = vmatprep.subr.mxu0 0.0
    %367 = vmatpush2.msra.mxu0 0.0
    %368 = vmatprep.subr.mxu0 0.0
    %369 = vmatpush2.msra.mxu0 0.0
    %370 = vmatprep.subr.mxu0 0.0
    %371 = vmatpush2.msra.mxu0 0.0
    %372 = vmatprep.subr.mxu0 0.0
    %373 = vmatpush2.msra.mxu0 0.0
    %374 = vmatprep.subr.mxu0 0.0
    %375 = vmatpush2.msra.mxu0 0.0
    %376 = vmatprep.subr.mxu0 0.0
    %377 = vmatpush2.msra.mxu0 0.0
    %378 = vmatprep.subr.mxu0 0.0
    %379 = vmatpush2.msra.mxu0 0.0
    %380 = vmatprep.mubr.f32.mxu0 0.0
    %381 = vmatmul.mubr.f32.gmra.mxu0 %v314
    %v382 = vpop.f32.mrf.mxu0
    %v383 = vadd.f32 %v312, %v382
    %v384 = vpop.f32.mrf.mxu0
    %385 = vdwg.mxu0
    %386 = vst [vmem:[#allocation4] sm:$0x1] %v383
    // Predicated region
    $region34: #{tpu_custom_call.1} parent=1 // pred_check
      _
    $region35: #{tpu_custom_call.1} parent=1 // pred_check_branch
      %388 = sbr.rel (0) target = $region37
    $region36: #{tpu_custom_call.1} parent=1 // pred_region
      %s390 = ssub.s32 16, 16
      %391 = vsyncadd [#allocation5], %s390
      %s393 = sshll.u32 [#allocation4], 4
      %s394 = int_to_ptr.vmem [resolvable:$true] %s393
      %396 = dma.vmem_to_hbm [thread:$0]  %s394, 16, %s8, [#allocation5]
    $region37: #{tpu_custom_call.1} parent=1 // pred_fallthru
      _
    // Predicated region
    $region38: #{tpu_custom_call.1} parent=1 // pred_check
      _
    $region39: #{tpu_custom_call.1} parent=1 // pred_check_branch
      %398 = sbr.rel (0) target = $region41
    $region40: #{tpu_custom_call.1} parent=1 // pred_region
      %399 = dma.done [#allocation5], 16
    $region41: #{tpu_custom_call.1} parent=1 // pred_fallthru
      _
    %400 = vsyncpa [#allocation5], 1

</llo_original>
